<compile_context>
chip_gen: v5e
topology: v5e:2x2
jax: 0.10.0
libtpu: 0.0.40
codegen_flags: <defaults>
</compile_context>

<pallas_src>
import jax
import jax.numpy as jnp
from jax.experimental import pallas as pl
from jax.experimental.pallas import tpu as pltpu

_LANE = 128
_DEFAULT_BLOCK_B = 256


def _round_up(x, m):
    return (x + m - 1) // m * m


def _sublane_pack(dtype):
    # f32 -> 8, bf16 -> 16, int8/fp8 -> 32 rows per packed vreg sublane group.
    return {4: 8, 2: 16, 1: 32}.get(jnp.dtype(dtype).itemsize, 8)


def _head_kernel(x_ref, w1_ref, b1_ref, w2_ref, b2_ref, out_ref):
    # x_ref  : [TB, H]  compute dtype (bf16 or f32)
    # w1_ref : [H, H]   dense weight, pre-transposed to [in, out]
    # b1_ref : [1, H]   f32
    # w2_ref : [H, Lp]  out_proj weight, pre-transposed & lane-padded
    # b2_ref : [1, Lp]  f32
    h = jnp.dot(x_ref[...], w1_ref[...], preferred_element_type=jnp.float32)
    h = jnp.tanh(h + b1_ref[...])                     # f32 bias + tanh (EUP)
    logits = jnp.dot(h.astype(w2_ref.dtype), w2_ref[...],
                     preferred_element_type=jnp.float32)
    out_ref[...] = (logits + b2_ref[...]).astype(out_ref.dtype)


def prepare_roberta_head_params(w_dense, b_dense, w_out, b_out,
                                compute_dtype=jnp.bfloat16):
    """One-time weight prep: transpose to [in, out], cast, lane-pad out_proj.

    Call once at model-load time; reuse the returned dict for every forward.
    """
    w_dense = jnp.asarray(w_dense)      # [H, H]  PyTorch [out, in]
    w_out = jnp.asarray(w_out)          # [L, H]  PyTorch [out, in]
    H = w_dense.shape[0]
    L = w_out.shape[0]
    Lp = _round_up(max(L, _LANE), _LANE)            # lane-dense output width

    w1t = w_dense.T.astype(compute_dtype)                         # [H, H]
    b1 = jnp.asarray(b_dense).astype(jnp.float32).reshape(1, H)   # [1, H]
    w2t = jnp.zeros((H, Lp), compute_dtype).at[:, :L].set(        # [H, Lp]
        w_out.T.astype(compute_dtype))
    b2 = jnp.zeros((1, Lp), jnp.float32).at[0, :L].set(           # [1, Lp]
        jnp.asarray(b_out).astype(jnp.float32))

    return dict(w1t=w1t, b1=b1, w2t=w2t, b2=b2, num_labels=L, hidden=H,
                compute_dtype=jnp.dtype(compute_dtype))


def roberta_classification_head_apply(features, params, *,
                                      block_b=_DEFAULT_BLOCK_B,
                                      out_dtype=jnp.float32):
    """features: [B, H] -> logits: [B, num_labels]."""
    B, H = features.shape
    assert H == params["hidden"], "hidden size mismatch"
    L = params["num_labels"]
    cdt = params["compute_dtype"]
    w1t, b1, w2t, b2 = params["w1t"], params["b1"], params["w2t"], params["b2"]
    Lp = w2t.shape[1]

    x = features.astype(cdt)

    # Batch tiling: single tile for small batches (avoid duplicating weight DMA
    # across TCs); multiples of 256 otherwise (fills the v6e/v7x MXU M dim).
    pack = _sublane_pack(cdt)
    if B <= block_b:
        TB = _round_up(B, pack)
    else:
        TB = block_b
    Bp = _round_up(B, TB)
    if Bp != B:
        x = jnp.pad(x, ((0, Bp - B), (0, 0)))

    grid = (Bp // TB,)
    out_itemsize = jnp.dtype(out_dtype).itemsize
    c_itemsize = jnp.dtype(cdt).itemsize

    cost = pl.CostEstimate(
        flops=2 * Bp * H * (H + Lp),
        transcendentals=Bp * H,
        bytes_accessed=(x.size * c_itemsize
                        + w1t.size * c_itemsize
                        + w2t.size * c_itemsize
                        + 4 * (b1.size + b2.size)
                        + Bp * Lp * out_itemsize),
    )

    # Resident-VMEM estimate: single-buffered weights + double-buffered
    # activation/output tiles + f32 intermediate. Raise the scoped limit only
    # when we actually need more than the ~32 MiB default.
    est_vmem = ((w1t.size + w2t.size) * c_itemsize
                + 4 * (b1.size + b2.size)
                + 2 * TB * H * c_itemsize
                + 2 * TB * Lp * out_itemsize
                + TB * H * 4
                + (1 << 20))
    extra_cp = {}
    if est_vmem > 24 * (1 << 20):
        extra_cp["vmem_limit_bytes"] = min(int(est_vmem * 1.25), 64 << 20)

    dim_sem = ("parallel",) if grid[0] > 1 else ("arbitrary",)

    def run(weight_mode):
        wkw = {} if weight_mode is None else {"pipeline_mode": weight_mode}
        call = pl.pallas_call(
            _head_kernel,
            out_shape=jax.ShapeDtypeStruct((Bp, Lp), out_dtype),
            grid=grid,
            in_specs=[
                pl.BlockSpec((TB, H), lambda i: (i, 0)),          # activations
                pl.BlockSpec((H, H), lambda i: (0, 0), **wkw),    # dense W^T
                pl.BlockSpec((1, H), lambda i: (0, 0), **wkw),    # dense b
                pl.BlockSpec((H, Lp), lambda i: (0, 0), **wkw),   # out_proj W^T
                pl.BlockSpec((1, Lp), lambda i: (0, 0), **wkw),   # out_proj b
            ],
            out_specs=pl.BlockSpec((TB, Lp), lambda i: (i, 0)),
            compiler_params=pltpu.CompilerParams(
                dimension_semantics=dim_sem, **extra_cp),
            cost_estimate=cost,
        )
        return call(x, w1t, b1, w2t, b2)

    try:
        # Grid-invariant weights: single buffer (saves VMEM, esp. on v7x).
        out = run(pl.Buffered(1))
    except Exception:
        # Fallback for Pallas versions that reject buffer_count=1.
        out = run(None)

    return out[:B, :L]


def roberta_classification_head(features, w_dense, b_dense, w_out, b_out, *,
                                compute_dtype=jnp.bfloat16,
                                block_b=_DEFAULT_BLOCK_B,
                                out_dtype=jnp.float32):
    """One-shot convenience wrapper (preps params on every call; prefer
    prepare_roberta_head_params + roberta_classification_head_apply)."""
    params = prepare_roberta_head_params(w_dense, b_dense, w_out, b_out,
                                         compute_dtype=compute_dtype)
    return roberta_classification_head_apply(features, params,
                                             block_b=block_b,
                                             out_dtype=out_dtype)


def _reference(features, w_dense, b_dense, w_out, b_out):
    h = jnp.tanh(features @ w_dense.T + b_dense)
    return h @ w_out.T + b_out


if __name__ == "__main__":
    # Small config consistent with the module: hidden_size=32, num_labels=3, batch=8.
    B, H, L = 8, 32, 3

    key = jax.random.PRNGKey(0)
    k_x, k_w1, k_b1, k_w2, k_b2 = jax.random.split(key, 5)

    features = jax.random.normal(k_x, (B, H), dtype=jnp.float32)
    # Synthetic parameters (shapes match nn.Linear: weight [out, in]).
    w_dense = jax.random.normal(k_w1, (H, H), dtype=jnp.float32) * 0.05
    b_dense = jax.random.normal(k_b1, (H,), dtype=jnp.float32) * 0.05
    w_out   = jax.random.normal(k_w2, (L, H), dtype=jnp.float32) * 0.05
    b_out   = jax.random.normal(k_b2, (L,), dtype=jnp.float32) * 0.05

    ref = _reference(features, w_dense, b_dense, w_out, b_out)

    # f32 compute path: must match the reference tightly.
    params_f32 = prepare_roberta_head_params(w_dense, b_dense, w_out, b_out,
                                             compute_dtype=jnp.float32)
    logits_f32 = roberta_classification_head_apply(features, params_f32)
    logits_f32 = jax.block_until_ready(logits_f32)
    assert logits_f32.shape == (B, L)
    assert jnp.allclose(logits_f32, ref, atol=1e-5, rtol=1e-5), "f32 mismatch vs reference"

    # Default bf16 matmul path (f32 accumulate, f32 tanh/bias): looser tolerance.
    params_bf16 = prepare_roberta_head_params(w_dense, b_dense, w_out, b_out)
    logits_bf16 = roberta_classification_head_apply(features, params_bf16)
    logits_bf16 = jax.block_until_ready(logits_bf16)
    assert logits_bf16.shape == (B, L)
    assert jnp.allclose(logits_bf16, ref, atol=2e-2, rtol=2e-2), "bf16 mismatch vs reference"

    # One-shot convenience wrapper (default bf16) also works.
    logits_conv = roberta_classification_head(features, w_dense, b_dense, w_out, b_out)
    logits_conv = jax.block_until_ready(logits_conv)
    assert jnp.allclose(logits_conv, ref, atol=2e-2, rtol=2e-2), "wrapper mismatch vs reference"

    print("KERNEL_OK")
</pallas_src>

<mosaic_0001>
module attributes {stable_mosaic.version = 11 : i64} {
  func.func @_head_kernel(%arg0: i32, %arg1: memref<8x32xf32, #tpu.memory_space<vmem>>, %arg2: memref<32x32xf32, #tpu.memory_space<vmem>>, %arg3: memref<1x32xf32, #tpu.memory_space<vmem>>, %arg4: memref<32x128xf32, #tpu.memory_space<vmem>>, %arg5: memref<1x128xf32, #tpu.memory_space<vmem>>, %arg6: memref<8x128xf32, #tpu.memory_space<vmem>>) attributes {dimension_semantics = [#tpu.dimension_semantics<arbitrary>], iteration_bounds = array<i64: 1>, scalar_prefetch = 0 : i64, scratch_operands = 0 : i64, tpu.core_type = #tpu.core_type<tc>, window_params = [{transform_indices = @transform_0, window_bounds = array<i64: 8, 32>}, {pipeline_mode = #tpu.pipeline_mode<synchronous>, transform_indices = @transform_1, window_bounds = array<i64: 32, 32>}, {pipeline_mode = #tpu.pipeline_mode<synchronous>, transform_indices = @transform_2, window_bounds = array<i64: 1, 32>}, {pipeline_mode = #tpu.pipeline_mode<synchronous>, transform_indices = @transform_3, window_bounds = array<i64: 32, 128>}, {pipeline_mode = #tpu.pipeline_mode<synchronous>, transform_indices = @transform_4, window_bounds = array<i64: 1, 128>}, {transform_indices = @transform_5, window_bounds = array<i64: 8, 128>}]} {
    %c0 = arith.constant 0 : index
    %c0_0 = arith.constant 0 : index
    %0 = vector.load %arg1[%c0, %c0_0] : memref<8x32xf32, #tpu.memory_space<vmem>>, vector<8x32xf32>
    %c0_1 = arith.constant 0 : index
    %c0_2 = arith.constant 0 : index
    %1 = vector.load %arg2[%c0_1, %c0_2] : memref<32x32xf32, #tpu.memory_space<vmem>>, vector<32x32xf32>
    %cst = arith.constant dense<0.000000e+00> : vector<8x32xf32>
    %2 = tpu.matmul %0, %1, %cst {dimension_numbers = #tpu.dot_dimension_numbers<[1], [0], [0], [1], [0, 0, 1, 1], [], []>} : vector<8x32xf32>, vector<32x32xf32>, vector<8x32xf32> -> vector<8x32xf32>
    %c0_3 = arith.constant 0 : index
    %c0_4 = arith.constant 0 : index
    %3 = vector.load %arg3[%c0_3, %c0_4] : memref<1x32xf32, #tpu.memory_space<vmem>>, vector<1x32xf32>
    %4 = vector.broadcast %3 : vector<1x32xf32> to vector<8x32xf32>
    %5 = arith.addf %2, %4 : vector<8x32xf32>
    %6 = math.tanh %5 : vector<8x32xf32>
    %c0_5 = arith.constant 0 : index
    %c0_6 = arith.constant 0 : index
    %7 = vector.load %arg4[%c0_5, %c0_6] : memref<32x128xf32, #tpu.memory_space<vmem>>, vector<32x128xf32>
    %cst_7 = arith.constant dense<0.000000e+00> : vector<8x128xf32>
    %8 = tpu.matmul %6, %7, %cst_7 {dimension_numbers = #tpu.dot_dimension_numbers<[1], [0], [0], [1], [0, 0, 1, 1], [], []>} : vector<8x32xf32>, vector<32x128xf32>, vector<8x128xf32> -> vector<8x128xf32>
    %c0_8 = arith.constant 0 : index
    %c0_9 = arith.constant 0 : index
    %9 = vector.load %arg5[%c0_8, %c0_9] : memref<1x128xf32, #tpu.memory_space<vmem>>, vector<1x128xf32>
    %10 = vector.broadcast %9 : vector<1x128xf32> to vector<8x128xf32>
    %11 = arith.addf %8, %10 : vector<8x128xf32>
    %c0_10 = arith.constant 0 : index
    %c0_11 = arith.constant 0 : index
    %12 = vector.load %arg6[%c0_10, %c0_11] : memref<8x128xf32, #tpu.memory_space<vmem>>, vector<8x128xf32>
    tpu.vector_store %arg6[%c0_10, %c0_11], %11 {strides = array<i32>} : memref<8x128xf32, #tpu.memory_space<vmem>>, vector<8x128xf32>,
    return
  }
  func.func @transform_0(%arg0: i32) -> (i32, i32) {
    %c0_i32 = arith.constant 0 : i32
    %c0_i32_0 = arith.constant 0 : i32
    return %arg0, %c0_i32 : i32, i32
  }
  func.func @transform_1(%arg0: i32) -> (i32, i32) {
    %c0_i32 = arith.constant 0 : i32
    %c0_i32_0 = arith.constant 0 : i32
    %c0_i32_1 = arith.constant 0 : i32
    return %c0_i32, %c0_i32_0 : i32, i32
  }
  func.func @transform_2(%arg0: i32) -> (i32, i32) {
    %c0_i32 = arith.constant 0 : i32
    %c0_i32_0 = arith.constant 0 : i32
    %c0_i32_1 = arith.constant 0 : i32
    return %c0_i32, %c0_i32_0 : i32, i32
  }
  func.func @transform_3(%arg0: i32) -> (i32, i32) {
    %c0_i32 = arith.constant 0 : i32
    %c0_i32_0 = arith.constant 0 : i32
    %c0_i32_1 = arith.constant 0 : i32
    return %c0_i32, %c0_i32_0 : i32, i32
  }
  func.func @transform_4(%arg0: i32) -> (i32, i32) {
    %c0_i32 = arith.constant 0 : i32
    %c0_i32_0 = arith.constant 0 : i32
    %c0_i32_1 = arith.constant 0 : i32
    return %c0_i32, %c0_i32_0 : i32, i32
  }
  func.func @transform_5(%arg0: i32) -> (i32, i32) {
    %c0_i32 = arith.constant 0 : i32
    %c0_i32_0 = arith.constant 0 : i32
    return %arg0, %c0_i32 : i32, i32
  }
}

module attributes {stable_mosaic.version = 11 : i64} {
  func.func @_head_kernel(%arg0: i32, %arg1: memref<8x32xf32, #tpu.memory_space<vmem>>, %arg2: memref<32x32xf32, #tpu.memory_space<vmem>>, %arg3: memref<1x32xf32, #tpu.memory_space<vmem>>, %arg4: memref<32x128xf32, #tpu.memory_space<vmem>>, %arg5: memref<1x128xf32, #tpu.memory_space<vmem>>, %arg6: memref<8x128xf32, #tpu.memory_space<vmem>>) attributes {dimension_semantics = [#tpu.dimension_semantics<arbitrary>], iteration_bounds = array<i64: 1>, scalar_prefetch = 0 : i64, scratch_operands = 0 : i64, tpu.core_type = #tpu.core_type<tc>, window_params = [{transform_indices = @transform_0, window_bounds = array<i64: 8, 32>}, {pipeline_mode = #tpu.pipeline_mode<synchronous>, transform_indices = @transform_1, window_bounds = array<i64: 32, 32>}, {pipeline_mode = #tpu.pipeline_mode<synchronous>, transform_indices = @transform_2, window_bounds = array<i64: 1, 32>}, {pipeline_mode = #tpu.pipeline_mode<synchronous>, transform_indices = @transform_3, window_bounds = array<i64: 32, 128>}, {pipeline_mode = #tpu.pipeline_mode<synchronous>, transform_indices = @transform_4, window_bounds = array<i64: 1, 128>}, {transform_indices = @transform_5, window_bounds = array<i64: 8, 128>}]} {
    %c0 = arith.constant 0 : index
    %c0_0 = arith.constant 0 : index
    %0 = vector.load %arg1[%c0, %c0_0] : memref<8x32xf32, #tpu.memory_space<vmem>>, vector<8x32xf32>
    %c0_1 = arith.constant 0 : index
    %c0_2 = arith.constant 0 : index
    %1 = vector.load %arg2[%c0_1, %c0_2] : memref<32x32xf32, #tpu.memory_space<vmem>>, vector<32x32xf32>
    %cst = arith.constant dense<0.000000e+00> : vector<8x32xf32>
    %2 = tpu.matmul %0, %1, %cst {dimension_numbers = #tpu.dot_dimension_numbers<[1], [0], [0], [1], [0, 0, 1, 1], [], []>} : vector<8x32xf32>, vector<32x32xf32>, vector<8x32xf32> -> vector<8x32xf32>
    %c0_3 = arith.constant 0 : index
    %c0_4 = arith.constant 0 : index
    %3 = vector.load %arg3[%c0_3, %c0_4] : memref<1x32xf32, #tpu.memory_space<vmem>>, vector<1x32xf32>
    %4 = vector.broadcast %3 : vector<1x32xf32> to vector<8x32xf32>
    %5 = arith.addf %2, %4 : vector<8x32xf32>
    %6 = math.tanh %5 : vector<8x32xf32>
    %c0_5 = arith.constant 0 : index
    %c0_6 = arith.constant 0 : index
    %7 = vector.load %arg4[%c0_5, %c0_6] : memref<32x128xf32, #tpu.memory_space<vmem>>, vector<32x128xf32>
    %cst_7 = arith.constant dense<0.000000e+00> : vector<8x128xf32>
    %8 = tpu.matmul %6, %7, %cst_7 {dimension_numbers = #tpu.dot_dimension_numbers<[1], [0], [0], [1], [0, 0, 1, 1], [], []>} : vector<8x32xf32>, vector<32x128xf32>, vector<8x128xf32> -> vector<8x128xf32>
    %c0_8 = arith.constant 0 : index
    %c0_9 = arith.constant 0 : index
    %9 = vector.load %arg5[%c0_8, %c0_9] : memref<1x128xf32, #tpu.memory_space<vmem>>, vector<1x128xf32>
    %10 = vector.broadcast %9 : vector<1x128xf32> to vector<8x128xf32>
    %11 = arith.addf %8, %10 : vector<8x128xf32>
    %c0_10 = arith.constant 0 : index
    %c0_11 = arith.constant 0 : index
    %12 = vector.load %arg6[%c0_10, %c0_11] : memref<8x128xf32, #tpu.memory_space<vmem>>, vector<8x128xf32>
    tpu.vector_store %arg6[%c0_10, %c0_11], %11 {strides = array<i32>} : memref<8x128xf32, #tpu.memory_space<vmem>>, vector<8x128xf32>,
    return
  }
  func.func @transform_0(%arg0: i32) -> (i32, i32) {
    %c0_i32 = arith.constant 0 : i32
    %c0_i32_0 = arith.constant 0 : i32
    return %arg0, %c0_i32 : i32, i32
  }
  func.func @transform_1(%arg0: i32) -> (i32, i32) {
    %c0_i32 = arith.constant 0 : i32
    %c0_i32_0 = arith.constant 0 : i32
    %c0_i32_1 = arith.constant 0 : i32
    return %c0_i32, %c0_i32_0 : i32, i32
  }
  func.func @transform_2(%arg0: i32) -> (i32, i32) {
    %c0_i32 = arith.constant 0 : i32
    %c0_i32_0 = arith.constant 0 : i32
    %c0_i32_1 = arith.constant 0 : i32
    return %c0_i32, %c0_i32_0 : i32, i32
  }
  func.func @transform_3(%arg0: i32) -> (i32, i32) {
    %c0_i32 = arith.constant 0 : i32
    %c0_i32_0 = arith.constant 0 : i32
    %c0_i32_1 = arith.constant 0 : i32
    return %c0_i32, %c0_i32_0 : i32, i32
  }
  func.func @transform_4(%arg0: i32) -> (i32, i32) {
    %c0_i32 = arith.constant 0 : i32
    %c0_i32_0 = arith.constant 0 : i32
    %c0_i32_1 = arith.constant 0 : i32
    return %c0_i32, %c0_i32_0 : i32, i32
  }
  func.func @transform_5(%arg0: i32) -> (i32, i32) {
    %c0_i32 = arith.constant 0 : i32
    %c0_i32_0 = arith.constant 0 : i32
    return %arg0, %c0_i32 : i32, i32
  }
}

</mosaic_0001>

<llo_original>
// kernel: tpu_custom_call.1
$region0: #{tpu_custom_call.1}
  #allocation0 [shape = 'u32[]', space=smem, size = 0x4, offset = 0x4, fixed_abs, tag = 'smem constant byte address 0x4 - core index']
  #allocation1 [shape = 'u32[72,128]{1,0:T(1,128)}', space=vmem, size = 0x9000, scoped, tag = 'internal scratch']
  %s0 = inlined_call_operand.hbm [shape: f32[8,32], index: 0, kind: input, shape index: {}]
  %s1 = inlined_call_operand.hbm [shape: f32[32,32], index: 1, kind: input, shape index: {}]
  %s2 = inlined_call_operand.vmem [shape: f32[1,32], index: 2, kind: input, shape index: {}]
  %s3 = inlined_call_operand.hbm [shape: f32[32,128], index: 3, kind: input, shape index: {}]
  %s4 = inlined_call_operand.vmem [shape: f32[1,128], index: 4, kind: input, shape index: {}]
  %s5 = inlined_call_operand.hbm [shape: f32[8,128], index: 5, kind: output, shape index: {}]
  %s6 = sld [smem:[#allocation0]]
  $region42: #{tpu_custom_call.1} parent=0
    _
  %s8 = ssub.s32 1, %s6
  %s9 = scalar_select 0, %s8, %s6
  $region1: #{tpu_custom_call.1} parent=0
    #allocation2 [shape = 'u8[4096]{0}', space=vmem, size = 0x1000, scoped, tag = 'input window, operand 0, single buffered']
    #allocation3 [shape = 's32[1]{0}', space=sflag, size = 0x4, scoped, tag = 'scoped memory for tpu_custom_call.1']
    #allocation4 [shape = 's32[1]{0}', space=sflag, size = 0x4, scoped, tag = 'scoped memory for tpu_custom_call.1']
    #allocation5 [shape = 'u8[16384]{0}', space=vmem, size = 0x4000, scoped, tag = 'input window, operand 1, single buffered']
    #allocation6 [shape = 's32[1]{0}', space=sflag, size = 0x4, scoped, tag = 'scoped memory for tpu_custom_call.1']
    #allocation7 [shape = 'u8[16384]{0}', space=vmem, size = 0x4000, scoped, tag = 'input window, operand 3, single buffered']
    #allocation8 [shape = 'u8[4096]{0}', space=vmem, size = 0x1000, scoped, tag = 'output window, operand 0, single buffered']
    %10 = vsyncpa [#allocation3], 0
    %11 = vsyncpa [#allocation6], 0
    %12 = vsyncpa [#allocation4], 0
    // Predicated region
    $region2: #{tpu_custom_call.1} parent=1 // pred_check
      _
    $region3: #{tpu_custom_call.1} parent=1 // pred_check_branch
      %14 = sbr.rel (0) target = $region5
    $region4: #{tpu_custom_call.1} parent=1 // pred_region
      %16 = vsyncadd [#allocation3], 0
      %s18 = sshll.u32 %s0, 4
      %s19 = int_to_ptr.hbm [resolvable:$true] %s18
      %s20 = sshll.u32 [#allocation2], 4
      %s21 = int_to_ptr.vmem [resolvable:$true] %s20
      %23 = dma.hbm_to_vmem [thread:$0]  %s19, 128, %s21, [#allocation3]
    $region5: #{tpu_custom_call.1} parent=1 // pred_fallthru
      _
    // Predicated region
    $region6: #{tpu_custom_call.1} parent=1 // pred_check
      _
    $region7: #{tpu_custom_call.1} parent=1 // pred_check_branch
      %25 = sbr.rel (0) target = $region9
    $region8: #{tpu_custom_call.1} parent=1 // pred_region
      %27 = vsyncadd [#allocation6], 0
      %s28 = sshll.u32 %s1, 4
      %s29 = int_to_ptr.hbm [resolvable:$true] %s28
      %s30 = sshll.u32 [#allocation5], 4
      %s31 = int_to_ptr.vmem [resolvable:$true] %s30
      %36 = dma.hbm_to_vmem [thread:$0]  %s29, 512, %s31, [#allocation6], 128, 128, 8
    $region9: #{tpu_custom_call.1} parent=1 // pred_fallthru
      _
    // Predicated region
    $region10: #{tpu_custom_call.1} parent=1 // pred_check
      _
    $region11: #{tpu_custom_call.1} parent=1 // pred_check_branch
      %38 = sbr.rel (0) target = $region13
    $region12: #{tpu_custom_call.1} parent=1 // pred_region
      _
    $region13: #{tpu_custom_call.1} parent=1 // pred_fallthru
      _
    // Predicated region
    $region14: #{tpu_custom_call.1} parent=1 // pred_check
      _
    $region15: #{tpu_custom_call.1} parent=1 // pred_check_branch
      %40 = sbr.rel (0) target = $region17
    $region16: #{tpu_custom_call.1} parent=1 // pred_region
      %42 = vsyncadd [#allocation6], 0
      %s43 = sshll.u32 %s3, 4
      %s44 = int_to_ptr.hbm [resolvable:$true] %s43
      %s45 = sshll.u32 [#allocation7], 4
      %s46 = int_to_ptr.vmem [resolvable:$true] %s45
      %51 = dma.hbm_to_vmem [thread:$0]  %s44, 512, %s46, [#allocation6], 128, 128, 8
    $region17: #{tpu_custom_call.1} parent=1 // pred_fallthru
      _
    // Predicated region
    $region18: #{tpu_custom_call.1} parent=1 // pred_check
      _
    $region19: #{tpu_custom_call.1} parent=1 // pred_check_branch
      %53 = sbr.rel (0) target = $region21
    $region20: #{tpu_custom_call.1} parent=1 // pred_region
      _
    $region21: #{tpu_custom_call.1} parent=1 // pred_fallthru
      _
    // Predicated region
    $region22: #{tpu_custom_call.1} parent=1 // pred_check
      _
    $region23: #{tpu_custom_call.1} parent=1 // pred_check_branch
      %55 = sbr.rel (0) target = $region25
    $region24: #{tpu_custom_call.1} parent=1 // pred_region
      %57 = dma.done [#allocation3], 128
    $region25: #{tpu_custom_call.1} parent=1 // pred_fallthru
      _
    // Predicated region
    $region26: #{tpu_custom_call.1} parent=1 // pred_check
      _
    $region27: #{tpu_custom_call.1} parent=1 // pred_check_branch
      %59 = sbr.rel (0) target = $region29
    $region28: #{tpu_custom_call.1} parent=1 // pred_region
      %61 = dma.done [#allocation6], 512
    $region29: #{tpu_custom_call.1} parent=1 // pred_fallthru
      _
    // Predicated region
    $region30: #{tpu_custom_call.1} parent=1 // pred_check
      _
    $region31: #{tpu_custom_call.1} parent=1 // pred_check_branch
      %63 = sbr.rel (0) target = $region33
    $region32: #{tpu_custom_call.1} parent=1 // pred_region
      %65 = dma.done [#allocation6], 512
    $region33: #{tpu_custom_call.1} parent=1 // pred_fallthru
      _
    %v66 = vld [vmem:[#allocation2] sm:$0xff]
    %v67 = vld [vmem:[#allocation5] sm:$0xff]
    %v68 = vld [vmem:[#allocation5 + $0x8] sm:$0xff]
    %v69 = vld [vmem:[#allocation5 + $0x10] sm:$0xff]
    %v70 = vld [vmem:[#allocation5 + $0x18] sm:$0xff]
    %v71 = vld [vmem:[%s2] sm:$0x1]
    %v73 = vperm.slane %v71, 0
    %vm75 = vcmask 261120
    %v77 = vsel %vm75, %v66, 0
    %79 = vmatpush.msra.mxu0 0.0
    %80 = vmatpush.msra.mxu0 0.0
    %81 = vmatpush.msra.mxu0 0.0
    %82 = vmatpush.msra.mxu0 0.0
    %83 = vmatpush.msra.mxu0 0.0
    %84 = vmatpush.msra.mxu0 0.0
    %85 = vmatpush.msra.mxu0 0.0
    %86 = vmatpush.msra.mxu0 0.0
    %87 = vmatpush.msra.mxu0 0.0
    %88 = vmatpush.msra.mxu0 0.0
    %89 = vmatpush.msra.mxu0 0.0
    %90 = vmatpush.msra.mxu0 0.0
    %91 = vmatpush.msra.mxu0 %v70
    %92 = vmatpush.msra.mxu0 %v69
    %93 = vmatpush.msra.mxu0 %v68
    %94 = vmatpush.msra.mxu0 %v67
    %95 = vmatmul.f32.gmra.mxu0 %v77
    %v96 = vpop.f32.mrf.mxu0
    %v97 = vadd.f32 %v73, %v96
    %98 = vdwg.mxu0
    %v99 = vtanh.pop %v97
    %v100 = vld [vmem:[#allocation7] sm:$0xff]
    %v101 = vld [vmem:[#allocation7 + $0x8] sm:$0xff]
    %v102 = vld [vmem:[#allocation7 + $0x10] sm:$0xff]
    %v103 = vld [vmem:[#allocation7 + $0x18] sm:$0xff]
    %v104 = vld [vmem:[%s4] sm:$0x1]
    %v106 = vperm.slane %v104, 0
    %v109 = vsel %vm75, %v99, 0
    %111 = vmatpush.msra.mxu0 0.0
    %112 = vmatpush.msra.mxu0 0.0
    %113 = vmatpush.msra.mxu0 0.0
    %114 = vmatpush.msra.mxu0 0.0
    %115 = vmatpush.msra.mxu0 0.0
    %116 = vmatpush.msra.mxu0 0.0
    %117 = vmatpush.msra.mxu0 0.0
    %118 = vmatpush.msra.mxu0 0.0
    %119 = vmatpush.msra.mxu0 0.0
    %120 = vmatpush.msra.mxu0 0.0
    %121 = vmatpush.msra.mxu0 0.0
    %122 = vmatpush.msra.mxu0 0.0
    %123 = vmatpush.msra.mxu0 %v103
    %124 = vmatpush.msra.mxu0 %v102
    %125 = vmatpush.msra.mxu0 %v101
    %126 = vmatpush.msra.mxu0 %v100
    %127 = vmatmul.f32.gmra.mxu0 %v109
    %v128 = vpop.f32.mrf.mxu0
    %v129 = vadd.f32 %v106, %v128
    %130 = vdwg.mxu0
    %131 = vst [vmem:[#allocation8] sm:$0xff] %v129
    // Predicated region
    $region34: #{tpu_custom_call.1} parent=1 // pred_check
      _
    $region35: #{tpu_custom_call.1} parent=1 // pred_check_branch
      %133 = sbr.rel (0) target = $region37
    $region36: #{tpu_custom_call.1} parent=1 // pred_region
      %135 = vsyncadd [#allocation4], 0
      %s137 = sshll.u32 [#allocation8], 4
      %s138 = int_to_ptr.vmem [resolvable:$true] %s137
      %s139 = sshll.u32 %s5, 4
      %s140 = int_to_ptr.hbm [resolvable:$true] %s139
      %142 = dma.vmem_to_hbm [thread:$0]  %s138, 128, %s140, [#allocation4]
    $region37: #{tpu_custom_call.1} parent=1 // pred_fallthru
      _
    // Predicated region
    $region38: #{tpu_custom_call.1} parent=1 // pred_check
      _
    $region39: #{tpu_custom_call.1} parent=1 // pred_check_branch
      %144 = sbr.rel (0) target = $region41
    $region40: #{tpu_custom_call.1} parent=1 // pred_region
      %146 = dma.done [#allocation4], 128
    $region41: #{tpu_custom_call.1} parent=1 // pred_fallthru
      _
    %147 = vsyncpa [#allocation3], 1
    %148 = vsyncpa [#allocation6], 1
    %149 = vsyncpa [#allocation4], 1

// kernel: tpu_custom_call.1
$region0: #{tpu_custom_call.1}
  #allocation0 [shape = 'u32[]', space=smem, size = 0x4, offset = 0x4, fixed_abs, tag = 'smem constant byte address 0x4 - core index']
  #allocation1 [shape = 'u32[72,128]{1,0:T(1,128)}', space=vmem, size = 0x9000, scoped, tag = 'internal scratch']
  %s0 = inlined_call_operand.hbm [shape: f32[8,32], index: 0, kind: input, shape index: {}]
  %s1 = inlined_call_operand.hbm [shape: f32[32,32], index: 1, kind: input, shape index: {}]
  %s2 = inlined_call_operand.vmem [shape: f32[1,32], index: 2, kind: input, shape index: {}]
  %s3 = inlined_call_operand.hbm [shape: f32[32,128], index: 3, kind: input, shape index: {}]
  %s4 = inlined_call_operand.vmem [shape: f32[1,128], index: 4, kind: input, shape index: {}]
  %s5 = inlined_call_operand.hbm [shape: f32[8,128], index: 5, kind: output, shape index: {}]
  %s6 = sld [smem:[#allocation0]]
  $region42: #{tpu_custom_call.1} parent=0
    _
  %s8 = ssub.s32 1, %s6
  %s9 = scalar_select 0, %s8, %s6
  $region1: #{tpu_custom_call.1} parent=0
    #allocation2 [shape = 'u8[4096]{0}', space=vmem, size = 0x1000, scoped, tag = 'input window, operand 0, single buffered']
    #allocation3 [shape = 's32[1]{0}', space=sflag, size = 0x4, scoped, tag = 'scoped memory for tpu_custom_call.1']
    #allocation4 [shape = 's32[1]{0}', space=sflag, size = 0x4, scoped, tag = 'scoped memory for tpu_custom_call.1']
    #allocation5 [shape = 'u8[16384]{0}', space=vmem, size = 0x4000, scoped, tag = 'input window, operand 1, single buffered']
    #allocation6 [shape = 's32[1]{0}', space=sflag, size = 0x4, scoped, tag = 'scoped memory for tpu_custom_call.1']
    #allocation7 [shape = 'u8[16384]{0}', space=vmem, size = 0x4000, scoped, tag = 'input window, operand 3, single buffered']
    #allocation8 [shape = 'u8[4096]{0}', space=vmem, size = 0x1000, scoped, tag = 'output window, operand 0, single buffered']
    %10 = vsyncpa [#allocation3], 0
    %11 = vsyncpa [#allocation6], 0
    %12 = vsyncpa [#allocation4], 0
    // Predicated region
    $region2: #{tpu_custom_call.1} parent=1 // pred_check
      _
    $region3: #{tpu_custom_call.1} parent=1 // pred_check_branch
      %14 = sbr.rel (0) target = $region5
    $region4: #{tpu_custom_call.1} parent=1 // pred_region
      %16 = vsyncadd [#allocation3], 0
      %s18 = sshll.u32 %s0, 4
      %s19 = int_to_ptr.hbm [resolvable:$true] %s18
      %s20 = sshll.u32 [#allocation2], 4
      %s21 = int_to_ptr.vmem [resolvable:$true] %s20
      %23 = dma.hbm_to_vmem [thread:$0]  %s19, 128, %s21, [#allocation3]
    $region5: #{tpu_custom_call.1} parent=1 // pred_fallthru
      _
    // Predicated region
    $region6: #{tpu_custom_call.1} parent=1 // pred_check
      _
    $region7: #{tpu_custom_call.1} parent=1 // pred_check_branch
      %25 = sbr.rel (0) target = $region9
    $region8: #{tpu_custom_call.1} parent=1 // pred_region
      %27 = vsyncadd [#allocation6], 0
      %s28 = sshll.u32 %s1, 4
      %s29 = int_to_ptr.hbm [resolvable:$true] %s28
      %s30 = sshll.u32 [#allocation5], 4
      %s31 = int_to_ptr.vmem [resolvable:$true] %s30
      %36 = dma.hbm_to_vmem [thread:$0]  %s29, 512, %s31, [#allocation6], 128, 128, 8
    $region9: #{tpu_custom_call.1} parent=1 // pred_fallthru
      _
    // Predicated region
    $region10: #{tpu_custom_call.1} parent=1 // pred_check
      _
    $region11: #{tpu_custom_call.1} parent=1 // pred_check_branch
      %38 = sbr.rel (0) target = $region13
    $region12: #{tpu_custom_call.1} parent=1 // pred_region
      _
    $region13: #{tpu_custom_call.1} parent=1 // pred_fallthru
      _
    // Predicated region
    $region14: #{tpu_custom_call.1} parent=1 // pred_check
      _
    $region15: #{tpu_custom_call.1} parent=1 // pred_check_branch
      %40 = sbr.rel (0) target = $region17
    $region16: #{tpu_custom_call.1} parent=1 // pred_region
      %42 = vsyncadd [#allocation6], 0
      %s43 = sshll.u32 %s3, 4
      %s44 = int_to_ptr.hbm [resolvable:$true] %s43
      %s45 = sshll.u32 [#allocation7], 4
      %s46 = int_to_ptr.vmem [resolvable:$true] %s45
      %51 = dma.hbm_to_vmem [thread:$0]  %s44, 512, %s46, [#allocation6], 128, 128, 8
    $region17: #{tpu_custom_call.1} parent=1 // pred_fallthru
      _
    // Predicated region
    $region18: #{tpu_custom_call.1} parent=1 // pred_check
      _
    $region19: #{tpu_custom_call.1} parent=1 // pred_check_branch
      %53 = sbr.rel (0) target = $region21
    $region20: #{tpu_custom_call.1} parent=1 // pred_region
      _
    $region21: #{tpu_custom_call.1} parent=1 // pred_fallthru
      _
    // Predicated region
    $region22: #{tpu_custom_call.1} parent=1 // pred_check
      _
    $region23: #{tpu_custom_call.1} parent=1 // pred_check_branch
      %55 = sbr.rel (0) target = $region25
    $region24: #{tpu_custom_call.1} parent=1 // pred_region
      %57 = dma.done [#allocation3], 128
    $region25: #{tpu_custom_call.1} parent=1 // pred_fallthru
      _
    // Predicated region
    $region26: #{tpu_custom_call.1} parent=1 // pred_check
      _
    $region27: #{tpu_custom_call.1} parent=1 // pred_check_branch
      %59 = sbr.rel (0) target = $region29
    $region28: #{tpu_custom_call.1} parent=1 // pred_region
      %61 = dma.done [#allocation6], 512
    $region29: #{tpu_custom_call.1} parent=1 // pred_fallthru
      _
    // Predicated region
    $region30: #{tpu_custom_call.1} parent=1 // pred_check
      _
    $region31: #{tpu_custom_call.1} parent=1 // pred_check_branch
      %63 = sbr.rel (0) target = $region33
    $region32: #{tpu_custom_call.1} parent=1 // pred_region
      %65 = dma.done [#allocation6], 512
    $region33: #{tpu_custom_call.1} parent=1 // pred_fallthru
      _
    %v66 = vld [vmem:[#allocation2] sm:$0xff]
    %v67 = vld [vmem:[#allocation5] sm:$0xff]
    %v68 = vld [vmem:[#allocation5 + $0x8] sm:$0xff]
    %v69 = vld [vmem:[#allocation5 + $0x10] sm:$0xff]
    %v70 = vld [vmem:[#allocation5 + $0x18] sm:$0xff]
    %v71 = vld [vmem:[%s2] sm:$0x1]
    %v73 = vperm.slane %v71, 0
    %vm75 = vcmask 261120
    %v77 = vsel %vm75, %v66, 0
    %79 = vmatpush.msra.mxu0 0.0
    %80 = vmatpush.msra.mxu0 0.0
    %81 = vmatpush.msra.mxu0 0.0
    %82 = vmatpush.msra.mxu0 0.0
    %83 = vmatpush.msra.mxu0 0.0
    %84 = vmatpush.msra.mxu0 0.0
    %85 = vmatpush.msra.mxu0 0.0
    %86 = vmatpush.msra.mxu0 0.0
    %87 = vmatpush.msra.mxu0 0.0
    %88 = vmatpush.msra.mxu0 0.0
    %89 = vmatpush.msra.mxu0 0.0
    %90 = vmatpush.msra.mxu0 0.0
    %91 = vmatpush.msra.mxu0 %v70
    %92 = vmatpush.msra.mxu0 %v69
    %93 = vmatpush.msra.mxu0 %v68
    %94 = vmatpush.msra.mxu0 %v67
    %95 = vmatmul.f32.gmra.mxu0 %v77
    %v96 = vpop.f32.mrf.mxu0
    %v97 = vadd.f32 %v73, %v96
    %98 = vdwg.mxu0
    %v99 = vtanh.pop %v97
    %v100 = vld [vmem:[#allocation7] sm:$0xff]
    %v101 = vld [vmem:[#allocation7 + $0x8] sm:$0xff]
    %v102 = vld [vmem:[#allocation7 + $0x10] sm:$0xff]
    %v103 = vld [vmem:[#allocation7 + $0x18] sm:$0xff]
    %v104 = vld [vmem:[%s4] sm:$0x1]
    %v106 = vperm.slane %v104, 0
    %v109 = vsel %vm75, %v99, 0
    %111 = vmatpush.msra.mxu0 0.0
    %112 = vmatpush.msra.mxu0 0.0
    %113 = vmatpush.msra.mxu0 0.0
    %114 = vmatpush.msra.mxu0 0.0
    %115 = vmatpush.msra.mxu0 0.0
    %116 = vmatpush.msra.mxu0 0.0
    %117 = vmatpush.msra.mxu0 0.0
    %118 = vmatpush.msra.mxu0 0.0
    %119 = vmatpush.msra.mxu0 0.0
    %120 = vmatpush.msra.mxu0 0.0
    %121 = vmatpush.msra.mxu0 0.0
    %122 = vmatpush.msra.mxu0 0.0
    %123 = vmatpush.msra.mxu0 %v103
    %124 = vmatpush.msra.mxu0 %v102
    %125 = vmatpush.msra.mxu0 %v101
    %126 = vmatpush.msra.mxu0 %v100
    %127 = vmatmul.f32.gmra.mxu0 %v109
    %v128 = vpop.f32.mrf.mxu0
    %v129 = vadd.f32 %v106, %v128
    %130 = vdwg.mxu0
    %131 = vst [vmem:[#allocation8] sm:$0xff] %v129
    // Predicated region
    $region34: #{tpu_custom_call.1} parent=1 // pred_check
      _
    $region35: #{tpu_custom_call.1} parent=1 // pred_check_branch
      %133 = sbr.rel (0) target = $region37
    $region36: #{tpu_custom_call.1} parent=1 // pred_region
      %135 = vsyncadd [#allocation4], 0
      %s137 = sshll.u32 [#allocation8], 4
      %s138 = int_to_ptr.vmem [resolvable:$true] %s137
      %s139 = sshll.u32 %s5, 4
      %s140 = int_to_ptr.hbm [resolvable:$true] %s139
      %142 = dma.vmem_to_hbm [thread:$0]  %s138, 128, %s140, [#allocation4]
    $region37: #{tpu_custom_call.1} parent=1 // pred_fallthru
      _
    // Predicated region
    $region38: #{tpu_custom_call.1} parent=1 // pred_check
      _
    $region39: #{tpu_custom_call.1} parent=1 // pred_check_branch
      %144 = sbr.rel (0) target = $region41
    $region40: #{tpu_custom_call.1} parent=1 // pred_region
      %146 = dma.done [#allocation4], 128
    $region41: #{tpu_custom_call.1} parent=1 // pred_fallthru
      _
    %147 = vsyncpa [#allocation3], 1
    %148 = vsyncpa [#allocation6], 1
    %149 = vsyncpa [#allocation4], 1

</llo_original>
